<compile_context>
chip_gen: v6e
topology: v6e:2x2x1
jax: 0.10.0
libtpu: 0.0.40
codegen_flags: <defaults>
</compile_context>

<pallas_src>
import functools

import jax
import jax.numpy as jnp
from jax import lax
from jax.experimental import pallas as pl
from jax.experimental.pallas import tpu as pltpu


def _round_up(x, m):
    return ((x + m - 1) // m) * m


def _activation(h, act):
    if act == "relu":
        return jnp.maximum(h, 0.0)
    if act == "tanh":
        return jnp.tanh(h)
    raise ValueError(f"{act} is not supported.")


def _mlp_kernel(n_hidden_layers, act, x_ref, *refs):
    """Fused OligoMLP forward on one batch tile (transposed-activation layout).

    Activations are (features, tile_b): batch lives on lanes, so every hidden
    matmul has N = tile_b (good MXU utilisation) and the final hidden->1
    projection is a sublane reduction producing a lane-dense (1, tile_b) row.

    refs layout:
      refs[2*i], refs[2*i+1] : W_i (out, in), b_i (out, 1)    hidden layer i
      refs[-3], refs[-2]     : w_out (hidden, 1), b_out (1,)  [b_out in SMEM]
      refs[-1]               : o_ref (1, 1, tile_b)
    """
    o_ref = refs[-1]
    params = refs[:-1]

    w0 = params[0][...]                                # (hidden, in_features)
    b0 = params[1][...]                                # (hidden, 1)  f32
    # Cast x only for the matmul operand (no-op when matmul_dtype is None).
    x = x_ref[...].astype(w0.dtype)                    # (tile_b, in_features)

    # First hidden layer: h = W0 @ x.T without materialising x.T
    # (contraction on the last dim of both operands, "q @ k.T" style).
    # K = native feature count (e.g. 66); Mosaic handles the unaligned K.
    h = lax.dot_general(
        w0, x, (((1,), (1,)), ((), ())),
        preferred_element_type=jnp.float32)            # (hidden, tile_b) f32
    h = _activation(h + b0, act)                       # Dropout(p=0) == identity

    for i in range(1, n_hidden_layers):
        w = params[2 * i][...]                         # (hidden, hidden)
        b = params[2 * i + 1][...]                     # (hidden, 1)  f32
        h = jnp.dot(w, h.astype(w.dtype),
                    preferred_element_type=jnp.float32) + b
        h = _activation(h, act)

    # Final Linear(hidden -> 1): VPU multiply + sublane (XLU) reduction instead
    # of a nearly-empty 1-column MXU matmul; result is already lane-dense.
    w_out = params[-2][...]                            # (hidden, 1) f32
    b_out = params[-1][0]                              # scalar from SMEM
    val = jnp.sum(h * w_out, axis=0, keepdims=True) + b_out   # (1, tile_b)
    o_ref[...] = val[None].astype(o_ref.dtype)         # (1, 1, tile_b) dense store


def oligo_mlp_forward(x, params, *, tile_b=None, act="relu",
                      matmul_dtype=None, vmem_limit_bytes=None):
    """Run the fused OligoMLP forward kernel.

    Args:
      x: (batch, input_size) float32.
      params: list of (W, b) in PyTorch nn.Linear layout:
              hidden layers: W (hidden, in_features), b (hidden,)
              final layer:   W (1, hidden),          b (1,)
      tile_b: batch tile size (rows per grid step). Defaults to the whole batch
              for batch <= 1024, else ~2048 clamped so there are >= 2 tiles
              (v7x megacore). For very large batches sweep 1024-4096.
      act: 'relu' or 'tanh' (matches parse_act_function).
      matmul_dtype: optional dtype (e.g. jnp.bfloat16) for the *weights* /
              matmul operands only; x stays f32 in HBM and is cast in-kernel,
              accumulation and elementwise math stay float32.
      vmem_limit_bytes: optional explicit VMEM ceiling (rarely needed here).

    Returns:
      (batch,) float32 duplexing scores (== self.mlp(input).flatten()).
    """
    batch, input_size = x.shape
    n_hidden = len(params) - 1
    assert n_hidden >= 1, "need at least one hidden layer"

    # Sublane granule: 8 for f32 x blocks; use 16 when 16-bit matmul operands
    # are requested (bf16 sublane packing).
    granule = 8
    if matmul_dtype is not None and jnp.dtype(matmul_dtype).itemsize == 2:
        granule = 16

    if tile_b is None:
        if batch <= 1024:
            tile_b = batch
        else:
            # Sweet spot ~2048 rows/step, but keep >= 2 tiles so both v7x
            # TensorCores get work via the "parallel" grid axis.
            tile_b = min(2048, _round_up(pl.cdiv(batch, 2), 256))
    tile_b = _round_up(max(int(tile_b), granule), granule)
    num_tiles = pl.cdiv(batch, tile_b)

    # No feature/batch padding: x goes to the kernel as-is. The last (ragged)
    # batch block may contain unspecified rows; each output element depends
    # only on its own row and the extras are sliced off below.
    x = x.astype(jnp.float32)

    flat_args = [x]
    in_specs = [pl.BlockSpec((tile_b, input_size), lambda i: (i, 0))]

    # Hidden layers: weights/biases are whole-array blocks with a constant
    # index_map, so they are fetched once and stay resident in VMEM.
    for (w, b) in params[:-1]:
        w = w.astype(jnp.float32 if matmul_dtype is None else matmul_dtype)
        b = b.reshape(-1, 1).astype(jnp.float32)
        flat_args += [w, b]
        in_specs += [pl.BlockSpec(w.shape, lambda i: (0, 0)),
                     pl.BlockSpec(b.shape, lambda i: (0, 0))]

    # Final projection params: weight as a (hidden, 1) column (VPU/XLU path),
    # scalar bias in SMEM.
    w_f, b_f = params[-1]
    w_out = w_f.reshape(-1, 1).astype(jnp.float32)      # (hidden, 1)
    b_out = b_f.reshape(-1).astype(jnp.float32)         # (1,)
    flat_args += [w_out, b_out]
    in_specs += [pl.BlockSpec(w_out.shape, lambda i: (0, 0)),
                 pl.BlockSpec(memory_space=pltpu.MemorySpace.SMEM)]

    out = pl.pallas_call(
        functools.partial(_mlp_kernel, n_hidden, act),
        out_shape=jax.ShapeDtypeStruct((num_tiles, 1, tile_b), jnp.float32),
        grid_spec=pltpu.PrefetchScalarGridSpec(
            num_scalar_prefetch=0,
            grid=(num_tiles,),
            in_specs=in_specs,
            out_specs=pl.BlockSpec((1, 1, tile_b), lambda i: (i, 0, 0)),
        ),
        compiler_params=pltpu.CompilerParams(
            dimension_semantics=("parallel",),
            vmem_limit_bytes=vmem_limit_bytes,
        ),
    )(*flat_args)
    return out.reshape(-1)[:batch]


def init_oligo_mlp_params(key, input_size, hidden_size, n_layers):
    """Deterministic init mimicking nn.Linear's U(-1/sqrt(in), 1/sqrt(in)).

    Returns params in PyTorch layout: W (out_features, in_features), b (out,).
    """
    dims = [input_size] + [hidden_size] * n_layers
    params = []
    for i in range(len(dims) - 1):
        key, kw, kb = jax.random.split(key, 3)
        bound = 1.0 / float(jnp.sqrt(dims[i]))
        w = jax.random.uniform(kw, (dims[i + 1], dims[i]), jnp.float32,
                               -bound, bound)
        b = jax.random.uniform(kb, (dims[i + 1],), jnp.float32, -bound, bound)
        params.append((w, b))
    # Final Linear(hidden_size -> 1)
    key, kw, kb = jax.random.split(key, 3)
    bound = 1.0 / float(jnp.sqrt(dims[-1]))
    w = jax.random.uniform(kw, (1, dims[-1]), jnp.float32, -bound, bound)
    b = jax.random.uniform(kb, (1,), jnp.float32, -bound, bound)
    params.append((w, b))
    return params


def oligo_mlp_reference(x, params, act="relu"):
    """Pure-JAX reference of the same forward pass (PyTorch weight layout)."""
    h = x
    for (w, b) in params[:-1]:
        h = jnp.dot(h, w.T, precision=lax.Precision.HIGHEST) + b
        h = _activation(h, act)
    w, b = params[-1]
    return (jnp.dot(h, w.T, precision=lax.Precision.HIGHEST) + b).reshape(-1)


if __name__ == "__main__":
    key = jax.random.PRNGKey(0)

    # Shapes implied by the module: input = 4*seq_len + 4*seq_len + add_features
    seq_len = 8
    add_features = 2
    input_size = 4 * seq_len + 4 * seq_len + add_features  # 66
    hidden_size = 32
    n_layers = 2

    key, kp = jax.random.split(key)
    params = init_oligo_mlp_params(kp, input_size, hidden_size, n_layers)

    # 1) Small batch, default tiling (single grid step, whole batch per tile,
    #    native unpadded feature dim of 66).
    key, kx = jax.random.split(key)
    x = jax.random.normal(kx, (16, input_size), jnp.float32)
    out = jax.block_until_ready(oligo_mlp_forward(x, params))
    ref = oligo_mlp_reference(x, params)
    assert out.shape == (16,)
    assert jnp.allclose(out, ref, atol=1e-4, rtol=1e-4)

    # 1b) tanh activation path.
    out_t = jax.block_until_ready(oligo_mlp_forward(x, params, act="tanh"))
    ref_t = oligo_mlp_reference(x, params, act="tanh")
    assert jnp.allclose(out_t, ref_t, atol=1e-4, rtol=1e-4)

    # 2) Multi-tile path: grid > 1 with a ragged last block (200 rows, 64-row
    #    tiles -> 4 tiles, last one partially valid) and the lane-dense
    #    per-tile output.  (Production batches: default tile_b ~2048.)
    key, kx = jax.random.split(key)
    x2 = jax.random.normal(kx, (200, input_size), jnp.float32)
    out2 = jax.block_until_ready(oligo_mlp_forward(x2, params, tile_b=64))
    ref2 = oligo_mlp_reference(x2, params)
    assert out2.shape == (200,)
    assert jnp.allclose(out2, ref2, atol=1e-4, rtol=1e-4)

    print("KERNEL_OK")
</pallas_src>

<mosaic_0001>
module attributes {stable_mosaic.version = 11 : i64} {
  func.func @_mlp_kernel(%arg0: i32, %arg1: memref<16x66xf32, #tpu.memory_space<vmem>>, %arg2: memref<32x66xf32, #tpu.memory_space<vmem>>, %arg3: memref<32x1xf32, #tpu.memory_space<vmem>>, %arg4: memref<32x32xf32, #tpu.memory_space<vmem>>, %arg5: memref<32x1xf32, #tpu.memory_space<vmem>>, %arg6: memref<32x1xf32, #tpu.memory_space<vmem>>, %arg7: memref<1xf32, #tpu.memory_space<smem>>, %arg8: memref<1x1x16xf32, #tpu.memory_space<vmem>>) attributes {dimension_semantics = [#tpu.dimension_semantics<parallel>], iteration_bounds = array<i64: 1>, scalar_prefetch = 0 : i64, scratch_operands = 0 : i64, tpu.core_type = #tpu.core_type<tc>, window_params = [{transform_indices = @transform_0, window_bounds = array<i64: 16, 66>}, {pipeline_mode = #tpu.pipeline_mode<synchronous>, transform_indices = @transform_1, window_bounds = array<i64: 32, 66>}, {pipeline_mode = #tpu.pipeline_mode<synchronous>, transform_indices = @transform_2, window_bounds = array<i64: 32, 1>}, {pipeline_mode = #tpu.pipeline_mode<synchronous>, transform_indices = @transform_3, window_bounds = array<i64: 32, 32>}, {pipeline_mode = #tpu.pipeline_mode<synchronous>, transform_indices = @transform_4, window_bounds = array<i64: 32, 1>}, {pipeline_mode = #tpu.pipeline_mode<synchronous>, transform_indices = @transform_5, window_bounds = array<i64: 32, 1>}, {transform_indices = @transform_6, window_bounds = array<i64: 1>}, {transform_indices = @transform_7, window_bounds = array<i64: 1, 1, 16>}]} {
    %c0 = arith.constant 0 : index
    %c0_0 = arith.constant 0 : index
    %0 = vector.load %arg2[%c0, %c0_0] : memref<32x66xf32, #tpu.memory_space<vmem>>, vector<32x66xf32>
    %c0_1 = arith.constant 0 : index
    %c0_2 = arith.constant 0 : index
    %1 = vector.load %arg3[%c0_1, %c0_2] : memref<32x1xf32, #tpu.memory_space<vmem>>, vector<32x1xf32>
    %c0_3 = arith.constant 0 : index
    %c0_4 = arith.constant 0 : index
    %2 = vector.load %arg1[%c0_3, %c0_4] : memref<16x66xf32, #tpu.memory_space<vmem>>, vector<16x66xf32>
    %cst = arith.constant dense<0.000000e+00> : vector<32x16xf32>
    %3 = tpu.matmul %0, %2, %cst {dimension_numbers = #tpu.dot_dimension_numbers<[1], [1], [0], [0], [0, 0, 1, 0], [], []>} : vector<32x66xf32>, vector<16x66xf32>, vector<32x16xf32> -> vector<32x16xf32>
    %4 = vector.broadcast %1 : vector<32x1xf32> to vector<32x16xf32>
    %5 = arith.addf %3, %4 : vector<32x16xf32>
    %cst_5 = arith.constant 0.000000e+00 : f32
    %6 = vector.broadcast %cst_5 : f32 to vector<32x16xf32>
    %7 = arith.maximumf %5, %6 : vector<32x16xf32>
    %c0_6 = arith.constant 0 : index
    %c0_7 = arith.constant 0 : index
    %8 = vector.load %arg4[%c0_6, %c0_7] : memref<32x32xf32, #tpu.memory_space<vmem>>, vector<32x32xf32>
    %c0_8 = arith.constant 0 : index
    %c0_9 = arith.constant 0 : index
    %9 = vector.load %arg5[%c0_8, %c0_9] : memref<32x1xf32, #tpu.memory_space<vmem>>, vector<32x1xf32>
    %cst_10 = arith.constant dense<0.000000e+00> : vector<32x16xf32>
    %10 = tpu.matmul %8, %7, %cst_10 {dimension_numbers = #tpu.dot_dimension_numbers<[1], [0], [0], [1], [0, 0, 1, 1], [], []>} : vector<32x32xf32>, vector<32x16xf32>, vector<32x16xf32> -> vector<32x16xf32>
    %11 = vector.broadcast %9 : vector<32x1xf32> to vector<32x16xf32>
    %12 = arith.addf %10, %11 : vector<32x16xf32>
    %cst_11 = arith.constant 0.000000e+00 : f32
    %13 = vector.broadcast %cst_11 : f32 to vector<32x16xf32>
    %14 = arith.maximumf %12, %13 : vector<32x16xf32>
    %c0_12 = arith.constant 0 : index
    %c0_13 = arith.constant 0 : index
    %15 = vector.load %arg6[%c0_12, %c0_13] : memref<32x1xf32, #tpu.memory_space<vmem>>, vector<32x1xf32>
    %c0_14 = arith.constant 0 : index
    %16 = memref.load %arg7[%c0_14] : memref<1xf32, #tpu.memory_space<smem>>
    %17 = vector.broadcast %15 : vector<32x1xf32> to vector<32x16xf32>
    %18 = arith.mulf %14, %17 : vector<32x16xf32>
    %cst_15 = arith.constant dense<0.000000e+00> : vector<16xf32>
    %19 = vector.multi_reduction <add>, %18, %cst_15 [0] : vector<32x16xf32> to vector<16xf32>
    %20 = vector.shape_cast %19 : vector<16xf32> to vector<1x16xf32>
    %21 = vector.broadcast %16 : f32 to vector<1x16xf32>
    %22 = arith.addf %20, %21 : vector<1x16xf32>
    %23 = vector.shape_cast %22 : vector<1x16xf32> to vector<1x1x16xf32>
    %c0_16 = arith.constant 0 : index
    %c0_17 = arith.constant 0 : index
    %c0_18 = arith.constant 0 : index
    %24 = vector.load %arg8[%c0_16, %c0_17, %c0_18] : memref<1x1x16xf32, #tpu.memory_space<vmem>>, vector<1x1x16xf32>
    tpu.vector_store %arg8[%c0_16, %c0_17, %c0_18], %23 {strides = array<i32>} : memref<1x1x16xf32, #tpu.memory_space<vmem>>, vector<1x1x16xf32>,
    return
  }
  func.func @transform_0(%arg0: i32) -> (i32, i32) {
    %c0_i32 = arith.constant 0 : i32
    %c0_i32_0 = arith.constant 0 : i32
    return %arg0, %c0_i32 : i32, i32
  }
  func.func @transform_1(%arg0: i32) -> (i32, i32) {
    %c0_i32 = arith.constant 0 : i32
    %c0_i32_0 = arith.constant 0 : i32
    %c0_i32_1 = arith.constant 0 : i32
    return %c0_i32, %c0_i32_0 : i32, i32
  }
  func.func @transform_2(%arg0: i32) -> (i32, i32) {
    %c0_i32 = arith.constant 0 : i32
    %c0_i32_0 = arith.constant 0 : i32
    %c0_i32_1 = arith.constant 0 : i32
    return %c0_i32, %c0_i32_0 : i32, i32
  }
  func.func @transform_3(%arg0: i32) -> (i32, i32) {
    %c0_i32 = arith.constant 0 : i32
    %c0_i32_0 = arith.constant 0 : i32
    %c0_i32_1 = arith.constant 0 : i32
    return %c0_i32, %c0_i32_0 : i32, i32
  }
  func.func @transform_4(%arg0: i32) -> (i32, i32) {
    %c0_i32 = arith.constant 0 : i32
    %c0_i32_0 = arith.constant 0 : i32
    %c0_i32_1 = arith.constant 0 : i32
    return %c0_i32, %c0_i32_0 : i32, i32
  }
  func.func @transform_5(%arg0: i32) -> (i32, i32) {
    %c0_i32 = arith.constant 0 : i32
    %c0_i32_0 = arith.constant 0 : i32
    %c0_i32_1 = arith.constant 0 : i32
    return %c0_i32, %c0_i32_0 : i32, i32
  }
  func.func @transform_6(%arg0: i32) -> i32 {
    %c0_i32 = arith.constant 0 : i32
    %c0_i32_0 = arith.constant 0 : i32
    return %c0_i32 : i32
  }
  func.func @transform_7(%arg0: i32) -> (i32, i32, i32) {
    %c0_i32 = arith.constant 0 : i32
    %c0_i32_0 = arith.constant 0 : i32
    %c0_i32_1 = arith.constant 0 : i32
    return %arg0, %c0_i32, %c0_i32_0 : i32, i32, i32
  }
}

</mosaic_0001>

<llo_original>
// kernel: tpu_custom_call.1
$region0: #{tpu_custom_call.1}
  #allocation0 [shape = 'u32[]', space=smem, size = 0x4, offset = 0x4, fixed_abs, tag = 'smem constant byte address 0x4 - core index']
  #allocation1 [shape = 'u32[144,128]{1,0:T(1,128)}', space=vmem, size = 0x12000, scoped, tag = 'internal scratch']
  #allocation2 [shape = 'f32[1]{0:T(128)S(6)}', space=smem, size = 0x200, scoped, tag = 'scoped memory for tpu_custom_call.1']
  %s0 = inlined_call_operand.vmem [shape: f32[16,66], index: 0, kind: input, shape index: {}]
  %s1 = inlined_call_operand.vmem [shape: f32[32,66], index: 1, kind: input, shape index: {}]
  %s2 = inlined_call_operand.vmem [shape: f32[32,1], index: 2, kind: input, shape index: {}]
  %s3 = inlined_call_operand.vmem [shape: f32[32,32], index: 3, kind: input, shape index: {}]
  %s4 = inlined_call_operand.vmem [shape: f32[32,1], index: 4, kind: input, shape index: {}]
  %s5 = inlined_call_operand.vmem [shape: f32[32,1], index: 5, kind: input, shape index: {}]
  %s6 = inlined_call_operand.<no memory space> [shape: f32[1], index: 6, kind: input, shape index: {}]
  %s7 = inlined_call_operand.hbm [shape: f32[1,1,16], index: 7, kind: output, shape index: {}]
  %s8 = sld [smem:[#allocation0]]
  $region38: #{tpu_custom_call.1} parent=0
    _
  %s10 = ssub.s32 1, %s8
  %s11 = scalar_select 0, %s10, %s8
  %12 = sst [smem:[#allocation2]] %s6
  $region1: #{tpu_custom_call.1} parent=0
    #allocation3 [shape = 'u8[512]{0}', space=vmem, size = 0x400, scoped, tag = 'output window, operand 0, single buffered']
    #allocation4 [shape = 's32[1]{0}', space=sflag, size = 0x4, scoped, tag = 'scoped memory for tpu_custom_call.1']
    %13 = vsyncpa [#allocation4], 0
    // Predicated region
    $region2: #{tpu_custom_call.1} parent=1 // pred_check
      _
    $region3: #{tpu_custom_call.1} parent=1 // pred_check_branch
      %15 = sbr.rel (0) target = $region5
    $region4: #{tpu_custom_call.1} parent=1 // pred_region
      _
    $region5: #{tpu_custom_call.1} parent=1 // pred_fallthru
      _
    // Predicated region
    $region6: #{tpu_custom_call.1} parent=1 // pred_check
      _
    $region7: #{tpu_custom_call.1} parent=1 // pred_check_branch
      %17 = sbr.rel (0) target = $region9
    $region8: #{tpu_custom_call.1} parent=1 // pred_region
      _
    $region9: #{tpu_custom_call.1} parent=1 // pred_fallthru
      _
    // Predicated region
    $region10: #{tpu_custom_call.1} parent=1 // pred_check
      _
    $region11: #{tpu_custom_call.1} parent=1 // pred_check_branch
      %19 = sbr.rel (0) target = $region13
    $region12: #{tpu_custom_call.1} parent=1 // pred_region
      _
    $region13: #{tpu_custom_call.1} parent=1 // pred_fallthru
      _
    // Predicated region
    $region14: #{tpu_custom_call.1} parent=1 // pred_check
      _
    $region15: #{tpu_custom_call.1} parent=1 // pred_check_branch
      %21 = sbr.rel (0) target = $region17
    $region16: #{tpu_custom_call.1} parent=1 // pred_region
      _
    $region17: #{tpu_custom_call.1} parent=1 // pred_fallthru
      _
    // Predicated region
    $region18: #{tpu_custom_call.1} parent=1 // pred_check
      _
    $region19: #{tpu_custom_call.1} parent=1 // pred_check_branch
      %23 = sbr.rel (0) target = $region21
    $region20: #{tpu_custom_call.1} parent=1 // pred_region
      _
    $region21: #{tpu_custom_call.1} parent=1 // pred_fallthru
      _
    // Predicated region
    $region22: #{tpu_custom_call.1} parent=1 // pred_check
      _
    $region23: #{tpu_custom_call.1} parent=1 // pred_check_branch
      %25 = sbr.rel (0) target = $region25
    $region24: #{tpu_custom_call.1} parent=1 // pred_region
      _
    $region25: #{tpu_custom_call.1} parent=1 // pred_fallthru
      _
    // Predicated region
    $region26: #{tpu_custom_call.1} parent=1 // pred_check
      _
    $region27: #{tpu_custom_call.1} parent=1 // pred_check_branch
      %27 = sbr.rel (0) target = $region29
    $region28: #{tpu_custom_call.1} parent=1 // pred_region
      _
    $region29: #{tpu_custom_call.1} parent=1 // pred_fallthru
      _
    %v28 = vld [vmem:[%s1] sm:$0xff]
    %v29 = vld [vmem:[%s1 + $0x8] sm:$0xff]
    %v30 = vld [vmem:[%s1 + $0x10] sm:$0xff]
    %v31 = vld [vmem:[%s1 + $0x18] sm:$0xff]
    %v32 = vld [vmem:[%s2] sm:$0xff]
    %v33 = vld [vmem:[%s2 + $0x8] sm:$0xff]
    %v34 = vld [vmem:[%s2 + $0x10] sm:$0xff]
    %v35 = vld [vmem:[%s2 + $0x18] sm:$0xff]
    %v36 = vld [vmem:[%s0] sm:$0xff]
    %v37 = vld [vmem:[%s0 + $0x8] sm:$0xff]
    %39 = vset.pattern.permute.xlu0 0
    %40 = vperm.xlu0 %39, %v32
    %v41 = vpop.permute.xlu0 %40
    %44 = vset.pattern.permute.xlu0 0
    %45 = vperm.xlu0 %44, %v33
    %v46 = vpop.permute.xlu0 %45
    %49 = vset.pattern.permute.xlu0 0
    %50 = vperm.xlu0 %49, %v34
    %v51 = vpop.permute.xlu0 %50
    %54 = vset.pattern.permute.xlu0 0
    %55 = vperm.xlu0 %54, %v35
    %v56 = vpop.permute.xlu0 %55
    %vm58 = vcmask 539648
    %v60 = vsel %vm58, %v28, 0
    %v63 = vsel %vm58, %v29, 0
    %v66 = vsel %vm58, %v30, 0
    %v69 = vsel %vm58, %v31, 0
    %v72 = vsel %vm58, %v36, 0
    %v75 = vsel %vm58, %v37, 0
    %77 = vmatprep.subr.mxu0 0.0
    %78 = vmatpush1.xpose.msra.mxu0 0.0
    %79 = vmatprep.subr.mxu0 0.0
    %80 = vmatpush1.xpose.msra.mxu0 0.0
    %81 = vmatprep.subr.mxu0 0.0
    %82 = vmatpush1.xpose.msra.mxu0 0.0
    %83 = vmatprep.subr.mxu0 0.0
    %84 = vmatpush1.xpose.msra.mxu0 0.0
    %85 = vmatprep.subr.mxu0 0.0
    %86 = vmatpush1.xpose.msra.mxu0 0.0
    %87 = vmatprep.subr.mxu0 0.0
    %88 = vmatpush1.xpose.msra.mxu0 0.0
    %89 = vmatprep.subr.mxu0 0.0
    %90 = vmatpush1.xpose.msra.mxu0 0.0
    %91 = vmatprep.subr.mxu0 0.0
    %92 = vmatpush1.xpose.msra.mxu0 0.0
    %93 = vmatprep.subr.mxu0 0.0
    %94 = vmatpush1.xpose.msra.mxu0 0.0
    %95 = vmatprep.subr.mxu0 0.0
    %96 = vmatpush1.xpose.msra.mxu0 0.0
    %97 = vmatprep.subr.mxu0 0.0
    %98 = vmatpush1.xpose.msra.mxu0 0.0
    %99 = vmatprep.subr.mxu0 0.0
    %100 = vmatpush1.xpose.msra.mxu0 0.0
    %101 = vmatprep.subr.mxu0 0.0
    %102 = vmatpush1.xpose.msra.mxu0 0.0
    %103 = vmatprep.subr.mxu0 0.0
    %104 = vmatpush1.xpose.msra.mxu0 0.0
    %105 = vmatprep.subr.mxu0 0.0
    %106 = vmatpush1.xpose.msra.mxu0 %v75
    %107 = vmatprep.subr.mxu0 0.0
    %108 = vmatpush1.xpose.msra.mxu0 %v72
    %109 = vmatprep.subr.mxu0 0.0
    %110 = vmatpush2.xpose.msra.mxu0 0.0
    %111 = vmatprep.subr.mxu0 0.0
    %112 = vmatpush2.xpose.msra.mxu0 0.0
    %113 = vmatprep.subr.mxu0 0.0
    %114 = vmatpush2.xpose.msra.mxu0 0.0
    %115 = vmatprep.subr.mxu0 0.0
    %116 = vmatpush2.xpose.msra.mxu0 0.0
    %117 = vmatprep.subr.mxu0 0.0
    %118 = vmatpush2.xpose.msra.mxu0 0.0
    %119 = vmatprep.subr.mxu0 0.0
    %120 = vmatpush2.xpose.msra.mxu0 0.0
    %121 = vmatprep.subr.mxu0 0.0
    %122 = vmatpush2.xpose.msra.mxu0 0.0
    %123 = vmatprep.subr.mxu0 0.0
    %124 = vmatpush2.xpose.msra.mxu0 0.0
    %125 = vmatprep.subr.mxu0 0.0
    %126 = vmatpush2.xpose.msra.mxu0 0.0
    %127 = vmatprep.subr.mxu0 0.0
    %128 = vmatpush2.xpose.msra.mxu0 0.0
    %129 = vmatprep.subr.mxu0 0.0
    %130 = vmatpush2.xpose.msra.mxu0 0.0
    %131 = vmatprep.subr.mxu0 0.0
    %132 = vmatpush2.xpose.msra.mxu0 0.0
    %133 = vmatprep.subr.mxu0 0.0
    %134 = vmatpush2.xpose.msra.mxu0 0.0
    %135 = vmatprep.subr.mxu0 0.0
    %136 = vmatpush2.xpose.msra.mxu0 0.0
    %137 = vmatprep.subr.mxu0 0.0
    %138 = vmatpush2.xpose.msra.mxu0 0.0
    %139 = vmatprep.subr.mxu0 0.0
    %140 = vmatpush2.xpose.msra.mxu0 0.0
    %141 = vmatprep.mubr.f32.mxu0 0.0
    %142 = vmatmul.mubr.f32.gmra.mxu0 %v60
    %v143 = vpop.f32.mrf.mxu0
    %v144 = vadd.f32 %v41, %v143
    %v145 = vpop.f32.mrf.mxu0
    %146 = vmatprep.mubr.f32.mxu0 0.0
    %147 = vmatmul.mubr.f32.gmra.mxu0 %v63
    %v148 = vpop.f32.mrf.mxu0
    %v149 = vadd.f32 %v46, %v148
    %v150 = vpop.f32.mrf.mxu0
    %151 = vmatprep.mubr.f32.mxu0 0.0
    %152 = vmatmul.mubr.f32.gmra.mxu0 %v66
    %v153 = vpop.f32.mrf.mxu0
    %v154 = vadd.f32 %v51, %v153
    %v155 = vpop.f32.mrf.mxu0
    %156 = vmatprep.mubr.f32.mxu0 0.0
    %157 = vmatmul.mubr.f32.gmra.mxu0 %v69
    %v158 = vpop.f32.mrf.mxu0
    %v159 = vadd.f32 %v56, %v158
    %v160 = vpop.f32.mrf.mxu0
    %161 = vdwg.mxu0
    %v162 = vmax.f32 %v144, 0.0
    %v163 = vmax.f32 %v149, 0.0
    %v164 = vmax.f32 %v154, 0.0
    %v165 = vmax.f32 %v159, 0.0
    %v166 = vld [vmem:[%s3] sm:$0xff]
    %v167 = vld [vmem:[%s3 + $0x8] sm:$0xff]
    %v168 = vld [vmem:[%s3 + $0x10] sm:$0xff]
    %v169 = vld [vmem:[%s3 + $0x18] sm:$0xff]
    %v170 = vld [vmem:[%s4] sm:$0xff]
    %v171 = vld [vmem:[%s4 + $0x8] sm:$0xff]
    %v172 = vld [vmem:[%s4 + $0x10] sm:$0xff]
    %v173 = vld [vmem:[%s4 + $0x18] sm:$0xff]
    %175 = vset.pattern.permute.xlu0 0
    %176 = vperm.xlu0 %175, %v170
    %v177 = vpop.permute.xlu0 %176
    %180 = vset.pattern.permute.xlu0 0
    %181 = vperm.xlu0 %180, %v171
    %v182 = vpop.permute.xlu0 %181
    %185 = vset.pattern.permute.xlu0 0
    %186 = vperm.xlu0 %185, %v172
    %v187 = vpop.permute.xlu0 %186
    %190 = vset.pattern.permute.xlu0 0
    %191 = vperm.xlu0 %190, %v173
    %v192 = vpop.permute.xlu0 %191
    %vm194 = vcmask 261120
    %v196 = vsel %vm194, %v166, 0
    %v199 = vsel %vm194, %v167, 0
    %v202 = vsel %vm194, %v168, 0
    %v205 = vsel %vm194, %v169, 0
    %207 = vmatprep.subr.mxu0 0.0
    %208 = vmatpush1.msra.mxu0 0.0
    %209 = vmatprep.subr.mxu0 0.0
    %210 = vmatpush1.msra.mxu0 0.0
    %211 = vmatprep.subr.mxu0 0.0
    %212 = vmatpush1.msra.mxu0 0.0
    %213 = vmatprep.subr.mxu0 0.0
    %214 = vmatpush1.msra.mxu0 0.0
    %215 = vmatprep.subr.mxu0 0.0
    %216 = vmatpush1.msra.mxu0 0.0
    %217 = vmatprep.subr.mxu0 0.0
    %218 = vmatpush1.msra.mxu0 0.0
    %219 = vmatprep.subr.mxu0 0.0
    %220 = vmatpush1.msra.mxu0 0.0
    %221 = vmatprep.subr.mxu0 0.0
    %222 = vmatpush1.msra.mxu0 0.0
    %223 = vmatprep.subr.mxu0 0.0
    %224 = vmatpush1.msra.mxu0 0.0
    %225 = vmatprep.subr.mxu0 0.0
    %226 = vmatpush1.msra.mxu0 0.0
    %227 = vmatprep.subr.mxu0 0.0
    %228 = vmatpush1.msra.mxu0 0.0
    %229 = vmatprep.subr.mxu0 0.0
    %230 = vmatpush1.msra.mxu0 0.0
    %231 = vmatprep.subr.mxu0 0.0
    %232 = vmatpush1.msra.mxu0 %v165
    %233 = vmatprep.subr.mxu0 0.0
    %234 = vmatpush1.msra.mxu0 %v164
    %235 = vmatprep.subr.mxu0 0.0
    %236 = vmatpush1.msra.mxu0 %v163
    %237 = vmatprep.subr.mxu0 0.0
    %238 = vmatpush1.msra.mxu0 %v162
    %239 = vmatprep.subr.mxu0 0.0
    %240 = vmatpush2.msra.mxu0 0.0
    %241 = vmatprep.subr.mxu0 0.0
    %242 = vmatpush2.msra.mxu0 0.0
    %243 = vmatprep.subr.mxu0 0.0
    %244 = vmatpush2.msra.mxu0 0.0
    %245 = vmatprep.subr.mxu0 0.0
    %246 = vmatpush2.msra.mxu0 0.0
    %247 = vmatprep.subr.mxu0 0.0
    %248 = vmatpush2.msra.mxu0 0.0
    %249 = vmatprep.subr.mxu0 0.0
    %250 = vmatpush2.msra.mxu0 0.0
    %251 = vmatprep.subr.mxu0 0.0
    %252 = vmatpush2.msra.mxu0 0.0
    %253 = vmatprep.subr.mxu0 0.0
    %254 = vmatpush2.msra.mxu0 0.0
    %255 = vmatprep.subr.mxu0 0.0
    %256 = vmatpush2.msra.mxu0 0.0
    %257 = vmatprep.subr.mxu0 0.0
    %258 = vmatpush2.msra.mxu0 0.0
    %259 = vmatprep.subr.mxu0 0.0
    %260 = vmatpush2.msra.mxu0 0.0
    %261 = vmatprep.subr.mxu0 0.0
    %262 = vmatpush2.msra.mxu0 0.0
    %263 = vmatprep.subr.mxu0 0.0
    %264 = vmatpush2.msra.mxu0 0.0
    %265 = vmatprep.subr.mxu0 0.0
    %266 = vmatpush2.msra.mxu0 0.0
    %267 = vmatprep.subr.mxu0 0.0
    %268 = vmatpush2.msra.mxu0 0.0
    %269 = vmatprep.subr.mxu0 0.0
    %270 = vmatpush2.msra.mxu0 0.0
    %271 = vmatprep.mubr.f32.mxu0 0.0
    %272 = vmatmul.mubr.f32.gmra.mxu0 %v196
    %v273 = vpop.f32.mrf.mxu0
    %v274 = vadd.f32 %v177, %v273
    %v275 = vpop.f32.mrf.mxu0
    %276 = vmatprep.mubr.f32.mxu0 0.0
    %277 = vmatmul.mubr.f32.gmra.mxu0 %v199
    %v278 = vpop.f32.mrf.mxu0
    %v279 = vadd.f32 %v182, %v278
    %v280 = vpop.f32.mrf.mxu0
    %281 = vmatprep.mubr.f32.mxu0 0.0
    %282 = vmatmul.mubr.f32.gmra.mxu0 %v202
    %v283 = vpop.f32.mrf.mxu0
    %v284 = vadd.f32 %v187, %v283
    %v285 = vpop.f32.mrf.mxu0
    %286 = vmatprep.mubr.f32.mxu0 0.0
    %287 = vmatmul.mubr.f32.gmra.mxu0 %v205
    %v288 = vpop.f32.mrf.mxu0
    %v289 = vadd.f32 %v192, %v288
    %v290 = vpop.f32.mrf.mxu0
    %291 = vdwg.mxu0
    %v292 = vmax.f32 %v274, 0.0
    %v293 = vmax.f32 %v279, 0.0
    %v294 = vmax.f32 %v284, 0.0
    %v295 = vmax.f32 %v289, 0.0
    %v296 = vld [vmem:[%s5] sm:$0xff]
    %v297 = vld [vmem:[%s5 + $0x8] sm:$0xff]
    %v298 = vld [vmem:[%s5 + $0x10] sm:$0xff]
    %v299 = vld [vmem:[%s5 + $0x18] sm:$0xff]
    %s300 = sld [smem:[#allocation2]]
    %302 = vset.pattern.permute.xlu0 0
    %303 = vperm.xlu0 %302, %v296
    %v304 = vpop.permute.xlu0 %303
    %307 = vset.pattern.permute.xlu0 0
    %308 = vperm.xlu0 %307, %v297
    %v309 = vpop.permute.xlu0 %308
    %312 = vset.pattern.permute.xlu0 0
    %313 = vperm.xlu0 %312, %v298
    %v314 = vpop.permute.xlu0 %313
    %317 = vset.pattern.permute.xlu0 0
    %318 = vperm.xlu0 %317, %v299
    %v319 = vpop.permute.xlu0 %318
    %v321 = vmul.f32 %v292, %v304
    %v322 = vmul.f32 %v293, %v309
    %v323 = vmul.f32 %v294, %v314
    %v324 = vmul.f32 %v295, %v319
    %vm325 = vcmask 130048
    %v326 = vsel %vm325, %v321, 0.0
    %v327 = vsel %vm325, %v322, 0.0
    %v328 = vadd.f32 %v326, %v327
    %v329 = vsel %vm325, %v323, 0.0
    %v330 = vadd.f32 %v328, %v329
    %v331 = vsel %vm325, %v324, 0.0
    %v332 = vadd.f32 %v330, %v331
    %v333 = vrot.slane %v332, 4
    %v334 = vadd.f32 %v332, %v333
    %v335 = vrot.slane %v334, 2
    %v336 = vadd.f32 %v334, %v335
    %v337 = vrot.slane %v336, 1
    %v338 = vadd.f32 %v336, %v337
    %v339 = vstv %s300
    %v340 = vadd.f32 %v338, %v339
    %vm341 = vcmask 122880
    %342 = vst.msk [vmem:[#allocation3] sm:$0x1] %vm341, %v340
    // Predicated region
    $region30: #{tpu_custom_call.1} parent=1 // pred_check
      _
    $region31: #{tpu_custom_call.1} parent=1 // pred_check_branch
      %344 = sbr.rel (0) target = $region33
    $region32: #{tpu_custom_call.1} parent=1 // pred_region
      %s346 = ssub.s32 16, 16
      %347 = vsyncadd [#allocation4], %s346
      %s349 = sshll.u32 [#allocation3], 4
      %s350 = int_to_ptr.vmem [resolvable:$true] %s349
      %352 = dma.vmem_to_hbm [thread:$0]  %s350, 16, %s7, [#allocation4]
    $region33: #{tpu_custom_call.1} parent=1 // pred_fallthru
      _
    // Predicated region
    $region34: #{tpu_custom_call.1} parent=1 // pred_check
      _
    $region35: #{tpu_custom_call.1} parent=1 // pred_check_branch
      %354 = sbr.rel (0) target = $region37
    $region36: #{tpu_custom_call.1} parent=1 // pred_region
      %355 = dma.done [#allocation4], 16
    $region37: #{tpu_custom_call.1} parent=1 // pred_fallthru
      _
    %356 = vsyncpa [#allocation4], 1

</llo_original>
